<compile_context>
chip_gen: v7x
topology: tpu7x:2x2x1
jax: 0.10.0
libtpu: 0.0.40
codegen_flags: <defaults>
</compile_context>

<pallas_src>
import jax
import jax.numpy as jnp
from jax.experimental import pallas as pl
from jax.experimental.pallas import tpu as pltpu


# ----------------------------- kernels ------------------------------------ #

def _cls_kernel(h_ref, o_ref):
    # h_ref: (TB, S_BLK, H) -- only the leading S_BLK<=8 tokens are fetched.
    # o_ref: (TB, H)        -- CLS token (sequence position 0).
    o_ref[...] = h_ref[:, 0, :]


def _avg_kernel(mask_ref, h_ref, o_ref):
    # mask_ref: (TB, S) int32, h_ref: (TB, S, H), o_ref: (TB, H)
    h = h_ref[...]
    mask = mask_ref[...]
    masked = h * mask.astype(h.dtype)[:, :, None]            # input dtype
    num = jnp.sum(masked, axis=1, dtype=jnp.float32)          # (TB, H) f32
    den = jnp.sum(mask.astype(jnp.float32), axis=1, keepdims=True)
    den = jnp.maximum(den, 1.0)                                # guard 0-mask / pad rows
    o_ref[...] = (num * pl.reciprocal(den, approx=False)).astype(o_ref.dtype)


def _avg_two_kernel(mask_ref, ha_ref, hb_ref, o_ref):
    # Pools (ha + hb) / 2 with the attention mask ('avg_top2'/'avg_first_last').
    ha = ha_ref[...]
    hb = hb_ref[...]
    mask = mask_ref[...]
    h = (ha + hb) * 0.5                                        # input dtype
    masked = h * mask.astype(h.dtype)[:, :, None]
    num = jnp.sum(masked, axis=1, dtype=jnp.float32)           # (TB, H) f32
    den = jnp.sum(mask.astype(jnp.float32), axis=1, keepdims=True)
    den = jnp.maximum(den, 1.0)
    o_ref[...] = (num * pl.reciprocal(den, approx=False)).astype(o_ref.dtype)


# ----------------------------- wrappers ------------------------------------ #

_VMEM_BUDGET_BYTES = 12 * 1024 * 1024   # conservative: under v5e's 16 MiB default


def _choose_batch_tile(B, S, H, itemsize, n_hidden):
    """Largest TB in {min(8,B), ..., 1} whose pipelined working set fits VMEM."""
    tb = min(8, B)
    while tb > 1:
        # n_hidden inputs x 2 pipeline buffers + ~1 tile of f32 temporaries.
        working = (2 * n_hidden + 1) * tb * S * H * itemsize
        if working <= _VMEM_BUDGET_BYTES:
            break
        tb //= 2
    return max(tb, 1)


def _pad_batch(x, b_pad):
    b = x.shape[0]
    if b_pad == b:
        return x
    pad = [(0, b_pad - b)] + [(0, 0)] * (x.ndim - 1)
    return jnp.pad(x, pad)


def _cls_call(last_hidden):
    B, S, H = last_hidden.shape
    TB = min(8, B)
    n_blocks = pl.cdiv(B, TB)
    B_pad = n_blocks * TB
    h_p = _pad_batch(last_hidden, B_pad)
    # Read only the first min(S, 8) sequence rows (keeps the sublane block
    # size a multiple of 8 or full while cutting HBM traffic by ~S/8).
    S_BLK = min(S, 8)
    out = pl.pallas_call(
        _cls_kernel,
        out_shape=jax.ShapeDtypeStruct((B_pad, H), last_hidden.dtype),
        grid_spec=pltpu.PrefetchScalarGridSpec(
            num_scalar_prefetch=0,
            grid=(n_blocks,),
            in_specs=[pl.BlockSpec((TB, S_BLK, H), lambda b: (b, 0, 0))],
            out_specs=pl.BlockSpec((TB, H), lambda b: (b, 0)),
        ),
        compiler_params=pltpu.CompilerParams(
            dimension_semantics=("parallel",)),
    )(h_p)
    return out[:B] if B_pad != B else out


def _pooled_call(kernel, mask, hiddens, out_dtype):
    """Run a masked-average pooling kernel over batch tiles."""
    B, S = mask.shape
    H = hiddens[0].shape[-1]
    itemsize = jnp.dtype(hiddens[0].dtype).itemsize
    TB = _choose_batch_tile(B, S, H, itemsize, len(hiddens))
    n_blocks = pl.cdiv(B, TB)
    B_pad = n_blocks * TB

    mask_p = _pad_batch(mask, B_pad)                 # padded rows: all-zero mask
    hiddens_p = [_pad_batch(h, B_pad) for h in hiddens]

    in_specs = [pl.BlockSpec((TB, S), lambda b: (b, 0))]
    in_specs += [pl.BlockSpec((TB, S, H), lambda b: (b, 0, 0)) for _ in hiddens]

    out = pl.pallas_call(
        kernel,
        out_shape=jax.ShapeDtypeStruct((B_pad, H), out_dtype),
        grid_spec=pltpu.PrefetchScalarGridSpec(
            num_scalar_prefetch=0,
            grid=(n_blocks,),
            in_specs=in_specs,
            out_specs=pl.BlockSpec((TB, H), lambda b: (b, 0)),
        ),
        compiler_params=pltpu.CompilerParams(
            dimension_semantics=("parallel",)),
    )(mask_p, *hiddens_p)
    return out[:B] if B_pad != B else out


def bert_pooler(pool_type, encode_output):
    """JAX/Pallas equivalent of BertPooler.forward."""
    assert pool_type in ("cls", "avg", "avg_top2", "avg_first_last")
    attention_mask = encode_output["attention_mask"]          # (B, S) int32
    last_hidden = encode_output["last_hidden_state"]          # (B, S, H)
    hidden_states = encode_output["hidden_states"]            # list of (B, S, H)

    if pool_type == "cls":
        return _cls_call(last_hidden)
    elif pool_type == "avg":
        return _pooled_call(_avg_kernel, attention_mask, [last_hidden],
                            last_hidden.dtype)
    elif pool_type == "avg_top2":
        return _pooled_call(_avg_two_kernel, attention_mask,
                            [hidden_states[-1], hidden_states[-2]],
                            hidden_states[-1].dtype)
    else:  # avg_first_last
        return _pooled_call(_avg_two_kernel, attention_mask,
                            [hidden_states[0], hidden_states[-1]],
                            hidden_states[-1].dtype)


# ----------------------------- reference ----------------------------------- #

def bert_pooler_ref(pool_type, encode_output):
    mask = encode_output["attention_mask"].astype(jnp.float32)
    last_hidden = encode_output["last_hidden_state"]
    hs = encode_output["hidden_states"]
    if pool_type == "cls":
        return last_hidden[:, 0]
    if pool_type == "avg":
        return ((last_hidden * mask[..., None]).sum(1)
                / mask.sum(-1)[..., None])
    if pool_type == "avg_top2":
        h = (hs[-1] + hs[-2]) / 2.0
    else:
        h = (hs[0] + hs[-1]) / 2.0
    return (h * mask[..., None]).sum(1) / mask.sum(-1)[..., None]


# ------------------------------- main --------------------------------------- #

if __name__ == "__main__":
    B, S, H, L = 2, 8, 32, 4

    key = jax.random.PRNGKey(0)
    keys = jax.random.split(key, L + 2)

    hidden_states = [
        jax.random.normal(keys[i], (B, S, H), dtype=jnp.float32)
        for i in range(L)
    ]
    last_hidden = hidden_states[-1]

    # deterministic attention mask: first few tokens valid per row
    lengths = jnp.array([5, 7], dtype=jnp.int32)
    attention_mask = (jnp.arange(S)[None, :] < lengths[:, None]).astype(jnp.int32)

    encode_output = {
        "attention_mask": attention_mask,
        "last_hidden_state": last_hidden,
        "hidden_states": hidden_states,
    }

    ok = True
    for pool_type in ("cls", "avg", "avg_top2", "avg_first_last"):
        out = bert_pooler(pool_type, encode_output)
        out = jax.block_until_ready(out)
        ref = bert_pooler_ref(pool_type, encode_output)
        if out.shape != (B, H):
            ok = False
        if not jnp.allclose(out, ref, atol=1e-5, rtol=1e-5):
            ok = False

    if ok:
        print("KERNEL_OK")
</pallas_src>

<mosaic_0001>
module attributes {stable_mosaic.version = 11 : i64} {
  func.func @_cls_kernel(%arg0: i32, %arg1: memref<2x8x32xf32, #tpu.memory_space<vmem>>, %arg2: memref<2x32xf32, #tpu.memory_space<vmem>>) attributes {dimension_semantics = [#tpu.dimension_semantics<parallel>], iteration_bounds = array<i64: 1>, scalar_prefetch = 0 : i64, scratch_operands = 0 : i64, tpu.core_type = #tpu.core_type<tc>, window_params = [{transform_indices = @transform_0, window_bounds = array<i64: 2, 8, 32>}, {transform_indices = @transform_1, window_bounds = array<i64: 2, 32>}]} {
    %c0 = arith.constant 0 : index
    %c0_0 = arith.constant 0 : index
    %c0_1 = arith.constant 0 : index
    %0 = vector.load %arg1[%c0, %c0_0, %c0_1] : memref<2x8x32xf32, #tpu.memory_space<vmem>>, vector<2x1x32xf32>
    %1 = vector.shape_cast %0 : vector<2x1x32xf32> to vector<2x32xf32>
    %c0_2 = arith.constant 0 : index
    %c0_3 = arith.constant 0 : index
    %2 = vector.load %arg2[%c0_2, %c0_3] : memref<2x32xf32, #tpu.memory_space<vmem>>, vector<2x32xf32>
    tpu.vector_store %arg2[%c0_2, %c0_3], %1 {strides = array<i32>} : memref<2x32xf32, #tpu.memory_space<vmem>>, vector<2x32xf32>,
    return
  }
  func.func @transform_0(%arg0: i32) -> (i32, i32, i32) {
    %c0_i32 = arith.constant 0 : i32
    %c0_i32_0 = arith.constant 0 : i32
    %c0_i32_1 = arith.constant 0 : i32
    return %arg0, %c0_i32, %c0_i32_0 : i32, i32, i32
  }
  func.func @transform_1(%arg0: i32) -> (i32, i32) {
    %c0_i32 = arith.constant 0 : i32
    %c0_i32_0 = arith.constant 0 : i32
    return %arg0, %c0_i32 : i32, i32
  }
}

</mosaic_0001>

<llo_original>
// kernel: tpu_custom_call.1
$region0: #{tpu_custom_call.1}
  #allocation0 [shape = 'u32[]', space=smem, size = 0x4, offset = 0x4, fixed_abs, tag = 'smem constant byte address 0x4 - core index']
  #allocation1 [shape = 'u32[144,128]{1,0:T(1,128)}', space=vmem, size = 0x12000, scoped, tag = 'internal scratch']
  %s0 = inlined_call_operand.hbm [shape: f32[2,8,32], index: 0, kind: input, shape index: {}]
  %s1 = inlined_call_operand.hbm [shape: f32[2,32], index: 1, kind: output, shape index: {}]
  %s2 = sld [smem:[#allocation0]]
  $region18: #{tpu_custom_call.1} parent=0
    _
  %s4 = ssub.s32 1, %s2
  %s5 = scalar_select 0, %s4, %s2
  $region1: #{tpu_custom_call.1} parent=0
    #allocation2 [shape = 'u8[8192]{0}', space=vmem, size = 0x2000, scoped, tag = 'input window, operand 0, single buffered']
    #allocation3 [shape = 's32[1]{0}', space=sflag, size = 0x4, scoped, tag = 'scoped memory for tpu_custom_call.1']
    #allocation4 [shape = 's32[1]{0}', space=sflag, size = 0x4, scoped, tag = 'scoped memory for tpu_custom_call.1']
    #allocation5 [shape = 'u8[1024]{0}', space=vmem, size = 0x400, scoped, tag = 'output window, operand 0, single buffered']
    %6 = vsyncpa [#allocation3], 0
    %7 = vsyncpa [#allocation4], 0
    // Predicated region
    $region2: #{tpu_custom_call.1} parent=1 // pred_check
      _
    $region3: #{tpu_custom_call.1} parent=1 // pred_check_branch
      %9 = sbr.rel (0) target = $region5
    $region4: #{tpu_custom_call.1} parent=1 // pred_region
      %s11 = ssub.s32 256, 256
      %12 = vsyncadd [#allocation3], %s11
      %s13 = sshll.u32 [#allocation2], 4
      %s14 = int_to_ptr.vmem [resolvable:$true] %s13
      %19 = dma.hbm_to_vmem [thread:$0]  %s0, 256, %s14, [#allocation3], 128, 128, 8
    $region5: #{tpu_custom_call.1} parent=1 // pred_fallthru
      _
    // Predicated region
    $region6: #{tpu_custom_call.1} parent=1 // pred_check
      _
    $region7: #{tpu_custom_call.1} parent=1 // pred_check_branch
      %21 = sbr.rel (0) target = $region9
    $region8: #{tpu_custom_call.1} parent=1 // pred_region
      %22 = dma.done [#allocation3], 256
    $region9: #{tpu_custom_call.1} parent=1 // pred_fallthru
      _
    %v23 = vld [vmem:[#allocation2] sm:$0x1]
    %v24 = vld [vmem:[#allocation2 + $0x8] sm:$0x1]
    %v27 = vrot.slane %v24, 7
    %vm28 = vcmask 1041409
    %v29 = vsel %vm28, %v27, %v23
    %vm31 = vcmask 254976
    %32 = vst.msk [vmem:[#allocation5] sm:$0x3] %vm31, %v29
    // Predicated region
    $region10: #{tpu_custom_call.1} parent=1 // pred_check
      _
    $region11: #{tpu_custom_call.1} parent=1 // pred_check_branch
      %34 = sbr.rel (0) target = $region13
    $region12: #{tpu_custom_call.1} parent=1 // pred_region
      %s36 = ssub.s32 32, 32
      %37 = vsyncadd [#allocation4], %s36
      %s39 = sshll.u32 [#allocation5], 4
      %s40 = int_to_ptr.vmem [resolvable:$true] %s39
      %42 = dma.vmem_to_hbm [thread:$0]  %s40, 32, %s1, [#allocation4]
    $region13: #{tpu_custom_call.1} parent=1 // pred_fallthru
      _
    // Predicated region
    $region14: #{tpu_custom_call.1} parent=1 // pred_check
      _
    $region15: #{tpu_custom_call.1} parent=1 // pred_check_branch
      %44 = sbr.rel (0) target = $region17
    $region16: #{tpu_custom_call.1} parent=1 // pred_region
      %45 = dma.done [#allocation4], 32
    $region17: #{tpu_custom_call.1} parent=1 // pred_fallthru
      _
    %46 = vsyncpa [#allocation3], 1
    %47 = vsyncpa [#allocation4], 1

</llo_original>
